<compile_context>
chip_gen: v7x
topology: tpu7x:2x2x1
jax: 0.10.0
libtpu: 0.0.40
codegen_flags: <defaults>
</compile_context>

<pallas_src>
import numpy as np
import jax
import jax.numpy as jnp
from jax.experimental import pallas as pl
from jax.experimental.pallas import tpu as pltpu

_EPS = 1e-8
_NEG = -1e30        # padding value for the class-padded / query-padded logits
_CHUNK = 256        # lane-chunk size for the in-kernel loop


def _round_up(x, m):
    return ((x + m - 1) // m) * m


def _choose_tiling(n):
    """Return (tile_n, n_pad): tile_n a multiple of _CHUNK, n_pad a multiple of
    tile_n.  Single tile up to 2048 queries; above that an even tile count so
    v7x's two TensorCores split the grid evenly."""
    n_pad = _round_up(max(n, 1), _CHUNK)
    if n_pad <= 2048:
        return n_pad, n_pad
    num_tiles = -(-n_pad // 2048)
    if num_tiles % 2:
        num_tiles += 1                      # balanced 2-way split on v7x
    tile_n = _round_up(-(-n_pad // num_tiles), _CHUNK)
    return tile_n, tile_n * num_tiles


# ----------------------------------------------------------------------------
# Pallas kernel: per-tile partial sums of the three unnormalized losses.
# ----------------------------------------------------------------------------
def _criterion_kernel(logits_ref, slab_ref, out_ref):
    tile_n = slab_ref.shape[-1]
    n_chunks = tile_n // _CHUNK

    def chunk_body(c, carry):
        ce_s, l1_s, giou_s = carry
        start = pl.multiple_of(c * _CHUNK, _CHUNK)

        lg = logits_ref[:, pl.ds(start, _CHUNK)]      # (Cp1_pad, CHUNK)
        sl = slab_ref[:, pl.ds(start, _CHUNK)]        # (16, CHUNK)

        # ---- weighted cross-entropy: sum_q w * (logsumexp - picked) ---------
        m = jnp.max(lg, axis=0, keepdims=True)                      # (1, CHUNK)
        lse = jnp.log(jnp.sum(jnp.exp(lg - m), axis=0, keepdims=True))
        w = sl[9:10, :]                                              # weight
        wp = sl[10:11, :]                                            # w * picked
        ce_s = ce_s + jnp.sum(w * (m + lse) - wp)

        # ---- box losses (cxcywh clamped to [0,1], as in the reference) ------
        src = jnp.clip(sl[0:4, :], 0.0, 1.0)
        tgt = jnp.clip(sl[4:8, :], 0.0, 1.0)
        mask = sl[8:9, :]

        scx, scy, sw, sh = src[0:1, :], src[1:2, :], src[2:3, :], src[3:4, :]
        tcx, tcy, tw, th = tgt[0:1, :], tgt[1:2, :], tgt[2:3, :], tgt[3:4, :]

        l1 = (jnp.abs(scx - tcx) + jnp.abs(scy - tcy)
              + jnp.abs(sw - tw) + jnp.abs(sh - th))
        l1_s = l1_s + jnp.sum(l1 * mask)

        # cxcywh -> xyxy
        ax1, ay1 = scx - 0.5 * sw, scy - 0.5 * sh
        ax2, ay2 = scx + 0.5 * sw, scy + 0.5 * sh
        bx1, by1 = tcx - 0.5 * tw, tcy - 0.5 * th
        bx2, by2 = tcx + 0.5 * tw, tcy + 0.5 * th

        area_a = (ax2 - ax1) * (ay2 - ay1)
        area_b = (bx2 - bx1) * (by2 - by1)
        inter = (jnp.maximum(jnp.minimum(ax2, bx2) - jnp.maximum(ax1, bx1), 0.0)
                 * jnp.maximum(jnp.minimum(ay2, by2) - jnp.maximum(ay1, by1), 0.0))
        union = area_a + area_b - inter
        area_c = ((jnp.maximum(ax2, bx2) - jnp.minimum(ax1, bx1))
                  * (jnp.maximum(ay2, by2) - jnp.minimum(ay1, by1)))

        # eps guard keeps unmatched / padded rows finite; exact divides keep
        # the GIoU numerically close to the torch reference (box math is a
        # negligible fraction of the kernel).
        iou = inter / (union + _EPS)
        giou = iou - (area_c - union) / (area_c + _EPS)
        giou_s = giou_s + jnp.sum(mask * (1.0 - giou))
        return ce_s, l1_s, giou_s

    zero = jnp.float32(0.0)
    ce_s, l1_s, giou_s = jax.lax.fori_loop(
        0, n_chunks, chunk_body, (zero, zero, zero), unroll=True)

    # one lane-dense output row per tile: lanes 0/1/2 = ce/l1/giou
    lane = jax.lax.broadcasted_iota(jnp.int32, (1, 1, 128), 2)
    out_ref[...] = (jnp.where(lane == 0, ce_s, 0.0)
                    + jnp.where(lane == 1, l1_s, 0.0)
                    + jnp.where(lane == 2, giou_s, 0.0))


def criterion_sums_pallas(logits_t, slab, *, tile_n):
    """logits_t: (Cp1_pad, N_pad) lane-major logits; slab: (16, N_pad) packed
    per-query stream.  Returns (ce_sum, l1_sum, giou_sum) f32 scalars."""
    cp1_pad, n_pad = logits_t.shape
    assert n_pad % tile_n == 0 and tile_n % _CHUNK == 0
    assert slab.shape == (16, n_pad)
    num_tiles = n_pad // tile_n

    partials = pl.pallas_call(
        _criterion_kernel,
        out_shape=jax.ShapeDtypeStruct((num_tiles, 1, 128), jnp.float32),
        grid=(num_tiles,),
        in_specs=[
            pl.BlockSpec((cp1_pad, tile_n), lambda i: (0, i)),   # logits (lane-major)
            pl.BlockSpec((16, tile_n), lambda i: (0, i)),        # packed per-query slab
        ],
        out_specs=pl.BlockSpec((1, 1, 128), lambda i: (i, 0, 0)),
        compiler_params=pltpu.CompilerParams(
            dimension_semantics=("parallel",),
            vmem_limit_bytes=32 * 1024 * 1024),
    )(logits_t, slab)

    sums = jnp.sum(partials, axis=(0, 1))       # (128,)
    return sums[0], sums[1], sums[2]


# ----------------------------------------------------------------------------
# Host-side glue: matcher + compact target construction (not a kernel target).
# ----------------------------------------------------------------------------
def greedy_matcher(pred_logits, pred_boxes, targets):
    # TODO(synk): Hungarian matching (scipy linear_sum_assignment) replaced by a
    # deterministic greedy assignment; matching is data-dependent host-side
    # control flow with no clean Pallas equivalent.
    indices = []
    for i, t in enumerate(targets):
        logits = np.asarray(pred_logits[i], np.float64)          # (Q, C+1)
        prob = np.exp(logits - logits.max(-1, keepdims=True))
        prob = prob / prob.sum(-1, keepdims=True)
        labels = np.asarray(t["labels"])
        boxes = np.asarray(t["boxes"], np.float64)               # (n_i, 4)
        pb = np.asarray(pred_boxes[i], np.float64)               # (Q, 4)
        cost_class = -prob[:, labels]                            # (Q, n_i)
        cost_bbox = np.abs(pb[:, None, :] - boxes[None, :, :]).sum(-1)
        cost = cost_class + cost_bbox                            # (Q, n_i)
        used = np.zeros(pb.shape[0], dtype=bool)
        src_idx, tgt_idx = [], []
        for j in range(len(labels)):
            c = cost[:, j].copy()
            c[used] = np.inf
            q = int(np.argmin(c))
            used[q] = True
            src_idx.append(q)
            tgt_idx.append(j)
        indices.append((np.array(src_idx, np.int64), np.array(tgt_idx, np.int64)))
    return indices


def set_criterion_forward(outputs, targets, num_classes, weight_dict, eos_coef=0.1):
    pred_logits = jnp.asarray(outputs["pred_logits"], jnp.float32)   # (B, Q, C+1)
    pred_boxes = jnp.asarray(outputs["pred_boxes"], jnp.float32)     # (B, Q, 4)
    B, Q, Cp1 = pred_logits.shape

    if len(targets) == 0:
        z = jnp.float32(0.0)
        return {"loss_ce": z, "loss_bbox": z, "loss_giou": z}

    # The matcher is data-dependent host control flow: one D2H copy for it.
    logits_np = np.asarray(pred_logits)
    boxes_np = np.asarray(pred_boxes)
    indices = greedy_matcher(logits_np, boxes_np, targets)
    num_boxes = max(float(sum(len(t["labels"]) for t in targets)), 1.0)

    N = B * Q
    tile_n, N_pad = _choose_tiling(N)
    Cp1_pad = _round_up(Cp1, 8)

    empty_weight = np.ones((Cp1,), np.float32)
    empty_weight[-1] = eos_coef

    # Compact, matcher-dependent per-query targets built on host (small).
    target_classes = np.full((N,), num_classes, dtype=np.int32)
    target_boxes = np.zeros((N, 4), np.float32)
    match_mask = np.zeros((N,), np.float32)
    for i, (t, (src_i, tgt_i)) in enumerate(zip(targets, indices)):
        rows = i * Q + np.asarray(src_i, np.int64)
        labels = np.asarray(t["labels"], np.int32)
        boxes = np.asarray(t["boxes"], np.float32)
        target_classes[rows] = labels[tgt_i]
        target_boxes[rows] = boxes[tgt_i]
        match_mask[rows] = 1.0
    w_row = empty_weight[target_classes]                             # (N,)

    # Device-side layout: gather/pad/transpose with jnp so the big logits and
    # boxes never round-trip through numpy again.
    logits_2d = pred_logits.reshape(N, Cp1)
    tclass_dev = jnp.asarray(target_classes)
    picked = jnp.take_along_axis(logits_2d, tclass_dev[:, None], axis=1)[:, 0]
    w_dev = jnp.asarray(w_row)
    wp = w_dev * picked                                              # w * logit[target]

    logits_t = jnp.pad(logits_2d.T,
                       ((0, Cp1_pad - Cp1), (0, N_pad - N)),
                       constant_values=_NEG)                         # (Cp1_pad, N_pad)

    slab = jnp.zeros((16, N_pad), jnp.float32)
    slab = slab.at[0:4, :N].set(pred_boxes.reshape(N, 4).T)
    slab = slab.at[4:8, :N].set(jnp.asarray(target_boxes.T))
    slab = slab.at[8, :N].set(jnp.asarray(match_mask))
    slab = slab.at[9, :N].set(w_dev)
    slab = slab.at[10, :N].set(wp)

    ce_sum, l1_sum, giou_sum = criterion_sums_pallas(logits_t, slab, tile_n=tile_n)

    # This module uses F.cross_entropy(..., reduction='none').sum() / num_boxes,
    # so dividing the weighted-CE sum by num_boxes matches the reference.
    losses = {
        "loss_ce": ce_sum / num_boxes,
        "loss_bbox": l1_sum / num_boxes,
        "loss_giou": giou_sum / num_boxes,
    }
    for k in list(losses.keys()):
        if k in weight_dict:
            losses[k] = losses[k] * weight_dict[k]
    return losses


# ----------------------------------------------------------------------------
if __name__ == "__main__":
    key = jax.random.PRNGKey(0)
    B, Q, num_classes = 2, 8, 4          # pred_logits has num_classes+1 = 5 cols
    k1, k2, k3, k4, k5, k6 = jax.random.split(key, 6)

    pred_logits = jax.random.normal(k1, (B, Q, num_classes + 1), jnp.float32)
    pred_boxes = jax.nn.sigmoid(jax.random.normal(k2, (B, Q, 4), jnp.float32))

    # targets: batch 0 has 3 boxes, batch 1 has 2 boxes (cxcywh in [0,1])
    def make_boxes(k, n):
        b = jax.nn.sigmoid(jax.random.normal(k, (n, 4), jnp.float32))
        # keep w,h modest so boxes are well-formed
        return np.asarray(b).astype(np.float32) * np.array([1.0, 1.0, 0.5, 0.5],
                                                           np.float32)
    targets = [
        {"labels": np.asarray(jax.random.randint(k3, (3,), 0, num_classes)),
         "boxes": make_boxes(k4, 3)},
        {"labels": np.asarray(jax.random.randint(k5, (2,), 0, num_classes)),
         "boxes": make_boxes(k6, 2)},
    ]

    weight_dict = {"loss_ce": 1.0, "loss_bbox": 5.0, "loss_giou": 2.0}
    outputs = {"pred_logits": pred_logits, "pred_boxes": pred_boxes}

    losses = set_criterion_forward(outputs, targets, num_classes, weight_dict,
                                   eos_coef=0.1)
    for v in losses.values():
        jax.block_until_ready(v)

    assert all(bool(jnp.isfinite(v)) for v in losses.values())
    print("KERNEL_OK")
</pallas_src>

<mosaic_0001>
module attributes {stable_mosaic.version = 11 : i64} {
  func.func @_criterion_kernel(%arg0: i32, %arg1: memref<8x256xf32, #tpu.memory_space<vmem>>, %arg2: memref<16x256xf32, #tpu.memory_space<vmem>>, %arg3: memref<1x1x128xf32, #tpu.memory_space<vmem>>) attributes {dimension_semantics = [#tpu.dimension_semantics<parallel>], iteration_bounds = array<i64: 1>, scalar_prefetch = 0 : i64, scratch_operands = 0 : i64, tpu.core_type = #tpu.core_type<tc>, window_params = [{transform_indices = @transform_0, window_bounds = array<i64: 8, 256>}, {transform_indices = @transform_1, window_bounds = array<i64: 16, 256>}, {transform_indices = @transform_2, window_bounds = array<i64: 1, 1, 128>}]} {
    %cst = arith.constant 0.000000e+00 : f32
    %cst_0 = arith.constant 0.000000e+00 : f32
    %cst_1 = arith.constant 0.000000e+00 : f32
    %c0_i32 = arith.constant 0 : i32
    %c256_i32 = arith.constant 256 : i32
    %0 = arith.muli %c0_i32, %c256_i32 : i32
    %1 = tpu.assume_multiple %0, 256 : i32
    %c0 = arith.constant 0 : index
    %2 = arith.index_cast %1 : i32 to index
    %3 = vector.load %arg1[%c0, %2] : memref<8x256xf32, #tpu.memory_space<vmem>>, vector<8x256xf32>
    %c0_2 = arith.constant 0 : index
    %4 = arith.index_cast %1 : i32 to index
    %5 = vector.load %arg2[%c0_2, %4] : memref<16x256xf32, #tpu.memory_space<vmem>>, vector<16x256xf32>
    %cst_3 = arith.constant dense<0xFF800000> : vector<256xf32>
    %6 = vector.multi_reduction <maximumf>, %3, %cst_3 [0] : vector<8x256xf32> to vector<256xf32>
    %7 = vector.shape_cast %6 : vector<256xf32> to vector<1x256xf32>
    %8 = vector.broadcast %7 : vector<1x256xf32> to vector<8x256xf32>
    %9 = arith.subf %3, %8 : vector<8x256xf32>
    %10 = math.exp %9 : vector<8x256xf32>
    %cst_4 = arith.constant dense<0.000000e+00> : vector<256xf32>
    %11 = vector.multi_reduction <add>, %10, %cst_4 [0] : vector<8x256xf32> to vector<256xf32>
    %12 = vector.shape_cast %11 : vector<256xf32> to vector<1x256xf32>
    %13 = math.log %12 : vector<1x256xf32>
    %14 = vector.extract_strided_slice %5 {offsets = [9, 0], sizes = [1, 256], strides = [1, 1]} : vector<16x256xf32> to vector<1x256xf32>
    %15 = vector.extract_strided_slice %5 {offsets = [10, 0], sizes = [1, 256], strides = [1, 1]} : vector<16x256xf32> to vector<1x256xf32>
    %16 = arith.addf %7, %13 : vector<1x256xf32>
    %17 = arith.mulf %14, %16 : vector<1x256xf32>
    %18 = arith.subf %17, %15 : vector<1x256xf32>
    %19 = vector.shape_cast %18 : vector<1x256xf32> to vector<1x1x256xf32>
    %cst_5 = arith.constant dense<0.000000e+00> : vector<1xf32>
    %20 = vector.multi_reduction <add>, %19, %cst_5 [1, 2] : vector<1x1x256xf32> to vector<1xf32>
    %21 = vector.shape_cast %20 : vector<1xf32> to vector<1x1x1xf32>
    %22 = vector.extract %21[0, 0, 0] : f32 from vector<1x1x1xf32>
    %23 = arith.addf %cst, %22 : f32
    %24 = vector.extract_strided_slice %5 {offsets = [0, 0], sizes = [4, 256], strides = [1, 1]} : vector<16x256xf32> to vector<4x256xf32>
    %cst_6 = arith.constant 0.000000e+00 : f32
    %cst_7 = arith.constant 1.000000e+00 : f32
    %25 = vector.broadcast %cst_6 : f32 to vector<4x256xf32>
    %26 = arith.maximumf %25, %24 : vector<4x256xf32>
    %27 = vector.broadcast %cst_7 : f32 to vector<4x256xf32>
    %28 = arith.minimumf %27, %26 : vector<4x256xf32>
    %29 = vector.extract_strided_slice %5 {offsets = [4, 0], sizes = [4, 256], strides = [1, 1]} : vector<16x256xf32> to vector<4x256xf32>
    %cst_8 = arith.constant 0.000000e+00 : f32
    %cst_9 = arith.constant 1.000000e+00 : f32
    %30 = vector.broadcast %cst_8 : f32 to vector<4x256xf32>
    %31 = arith.maximumf %30, %29 : vector<4x256xf32>
    %32 = vector.broadcast %cst_9 : f32 to vector<4x256xf32>
    %33 = arith.minimumf %32, %31 : vector<4x256xf32>
    %34 = vector.extract_strided_slice %5 {offsets = [8, 0], sizes = [1, 256], strides = [1, 1]} : vector<16x256xf32> to vector<1x256xf32>
    %35 = vector.extract_strided_slice %28 {offsets = [0, 0], sizes = [1, 256], strides = [1, 1]} : vector<4x256xf32> to vector<1x256xf32>
    %36 = vector.extract_strided_slice %28 {offsets = [1, 0], sizes = [1, 256], strides = [1, 1]} : vector<4x256xf32> to vector<1x256xf32>
    %37 = vector.extract_strided_slice %28 {offsets = [2, 0], sizes = [1, 256], strides = [1, 1]} : vector<4x256xf32> to vector<1x256xf32>
    %38 = vector.extract_strided_slice %28 {offsets = [3, 0], sizes = [1, 256], strides = [1, 1]} : vector<4x256xf32> to vector<1x256xf32>
    %39 = vector.extract_strided_slice %33 {offsets = [0, 0], sizes = [1, 256], strides = [1, 1]} : vector<4x256xf32> to vector<1x256xf32>
    %40 = vector.extract_strided_slice %33 {offsets = [1, 0], sizes = [1, 256], strides = [1, 1]} : vector<4x256xf32> to vector<1x256xf32>
    %41 = vector.extract_strided_slice %33 {offsets = [2, 0], sizes = [1, 256], strides = [1, 1]} : vector<4x256xf32> to vector<1x256xf32>
    %42 = vector.extract_strided_slice %33 {offsets = [3, 0], sizes = [1, 256], strides = [1, 1]} : vector<4x256xf32> to vector<1x256xf32>
    %43 = arith.subf %35, %39 : vector<1x256xf32>
    %44 = math.absf %43 : vector<1x256xf32>
    %45 = arith.subf %36, %40 : vector<1x256xf32>
    %46 = math.absf %45 : vector<1x256xf32>
    %47 = arith.addf %44, %46 : vector<1x256xf32>
    %48 = arith.subf %37, %41 : vector<1x256xf32>
    %49 = math.absf %48 : vector<1x256xf32>
    %50 = arith.addf %47, %49 : vector<1x256xf32>
    %51 = arith.subf %38, %42 : vector<1x256xf32>
    %52 = math.absf %51 : vector<1x256xf32>
    %53 = arith.addf %50, %52 : vector<1x256xf32>
    %54 = arith.mulf %53, %34 : vector<1x256xf32>
    %55 = vector.shape_cast %54 : vector<1x256xf32> to vector<1x1x256xf32>
    %cst_10 = arith.constant dense<0.000000e+00> : vector<1xf32>
    %56 = vector.multi_reduction <add>, %55, %cst_10 [1, 2] : vector<1x1x256xf32> to vector<1xf32>
    %57 = vector.shape_cast %56 : vector<1xf32> to vector<1x1x1xf32>
    %58 = vector.extract %57[0, 0, 0] : f32 from vector<1x1x1xf32>
    %59 = arith.addf %cst_0, %58 : f32
    %cst_11 = arith.constant 5.000000e-01 : f32
    %60 = vector.broadcast %cst_11 : f32 to vector<1x256xf32>
    %61 = arith.mulf %60, %37 : vector<1x256xf32>
    %62 = arith.subf %35, %61 : vector<1x256xf32>
    %cst_12 = arith.constant 5.000000e-01 : f32
    %63 = vector.broadcast %cst_12 : f32 to vector<1x256xf32>
    %64 = arith.mulf %63, %38 : vector<1x256xf32>
    %65 = arith.subf %36, %64 : vector<1x256xf32>
    %cst_13 = arith.constant 5.000000e-01 : f32
    %66 = vector.broadcast %cst_13 : f32 to vector<1x256xf32>
    %67 = arith.mulf %66, %37 : vector<1x256xf32>
    %68 = arith.addf %35, %67 : vector<1x256xf32>
    %cst_14 = arith.constant 5.000000e-01 : f32
    %69 = vector.broadcast %cst_14 : f32 to vector<1x256xf32>
    %70 = arith.mulf %69, %38 : vector<1x256xf32>
    %71 = arith.addf %36, %70 : vector<1x256xf32>
    %cst_15 = arith.constant 5.000000e-01 : f32
    %72 = vector.broadcast %cst_15 : f32 to vector<1x256xf32>
    %73 = arith.mulf %72, %41 : vector<1x256xf32>
    %74 = arith.subf %39, %73 : vector<1x256xf32>
    %cst_16 = arith.constant 5.000000e-01 : f32
    %75 = vector.broadcast %cst_16 : f32 to vector<1x256xf32>
    %76 = arith.mulf %75, %42 : vector<1x256xf32>
    %77 = arith.subf %40, %76 : vector<1x256xf32>
    %cst_17 = arith.constant 5.000000e-01 : f32
    %78 = vector.broadcast %cst_17 : f32 to vector<1x256xf32>
    %79 = arith.mulf %78, %41 : vector<1x256xf32>
    %80 = arith.addf %39, %79 : vector<1x256xf32>
    %cst_18 = arith.constant 5.000000e-01 : f32
    %81 = vector.broadcast %cst_18 : f32 to vector<1x256xf32>
    %82 = arith.mulf %81, %42 : vector<1x256xf32>
    %83 = arith.addf %40, %82 : vector<1x256xf32>
    %84 = arith.subf %68, %62 : vector<1x256xf32>
    %85 = arith.subf %71, %65 : vector<1x256xf32>
    %86 = arith.mulf %84, %85 : vector<1x256xf32>
    %87 = arith.subf %80, %74 : vector<1x256xf32>
    %88 = arith.subf %83, %77 : vector<1x256xf32>
    %89 = arith.mulf %87, %88 : vector<1x256xf32>
    %90 = arith.minimumf %68, %80 : vector<1x256xf32>
    %91 = arith.maximumf %62, %74 : vector<1x256xf32>
    %92 = arith.subf %90, %91 : vector<1x256xf32>
    %cst_19 = arith.constant 0.000000e+00 : f32
    %93 = vector.broadcast %cst_19 : f32 to vector<1x256xf32>
    %94 = arith.maximumf %92, %93 : vector<1x256xf32>
    %95 = arith.minimumf %71, %83 : vector<1x256xf32>
    %96 = arith.maximumf %65, %77 : vector<1x256xf32>
    %97 = arith.subf %95, %96 : vector<1x256xf32>
    %cst_20 = arith.constant 0.000000e+00 : f32
    %98 = vector.broadcast %cst_20 : f32 to vector<1x256xf32>
    %99 = arith.maximumf %97, %98 : vector<1x256xf32>
    %100 = arith.mulf %94, %99 : vector<1x256xf32>
    %101 = arith.addf %86, %89 : vector<1x256xf32>
    %102 = arith.subf %101, %100 : vector<1x256xf32>
    %103 = arith.maximumf %68, %80 : vector<1x256xf32>
    %104 = arith.minimumf %62, %74 : vector<1x256xf32>
    %105 = arith.subf %103, %104 : vector<1x256xf32>
    %106 = arith.maximumf %71, %83 : vector<1x256xf32>
    %107 = arith.minimumf %65, %77 : vector<1x256xf32>
    %108 = arith.subf %106, %107 : vector<1x256xf32>
    %109 = arith.mulf %105, %108 : vector<1x256xf32>
    %cst_21 = arith.constant 9.99999993E-9 : f32
    %110 = vector.broadcast %cst_21 : f32 to vector<1x256xf32>
    %111 = arith.addf %102, %110 : vector<1x256xf32>
    %112 = arith.divf %100, %111 : vector<1x256xf32>
    %113 = arith.subf %109, %102 : vector<1x256xf32>
    %cst_22 = arith.constant 9.99999993E-9 : f32
    %114 = vector.broadcast %cst_22 : f32 to vector<1x256xf32>
    %115 = arith.addf %109, %114 : vector<1x256xf32>
    %116 = arith.divf %113, %115 : vector<1x256xf32>
    %117 = arith.subf %112, %116 : vector<1x256xf32>
    %cst_23 = arith.constant 1.000000e+00 : f32
    %118 = vector.broadcast %cst_23 : f32 to vector<1x256xf32>
    %119 = arith.subf %118, %117 : vector<1x256xf32>
    %120 = arith.mulf %34, %119 : vector<1x256xf32>
    %121 = vector.shape_cast %120 : vector<1x256xf32> to vector<1x1x256xf32>
    %cst_24 = arith.constant dense<0.000000e+00> : vector<1xf32>
    %122 = vector.multi_reduction <add>, %121, %cst_24 [1, 2] : vector<1x1x256xf32> to vector<1xf32>
    %123 = vector.shape_cast %122 : vector<1xf32> to vector<1x1x1xf32>
    %124 = vector.extract %123[0, 0, 0] : f32 from vector<1x1x1xf32>
    %125 = arith.addf %cst_1, %124 : f32
    %c1_i32 = arith.constant 1 : i32
    %126 = tpu.iota {dimensions = array<i32: 2>} : vector<1x1x128xi32>
    %c0_i32_25 = arith.constant 0 : i32
    %127 = vector.broadcast %c0_i32_25 : i32 to vector<1x1x128xi32>
    %128 = arith.cmpi eq, %126, %127 : vector<1x1x128xi32>
    %cst_26 = arith.constant 0.000000e+00 : f32
    %129 = vector.broadcast %23 : f32 to vector<1x1x128xf32>
    %130 = vector.broadcast %cst_26 : f32 to vector<1x1x128xf32>
    %131 = arith.select %128, %129, %130 : vector<1x1x128xi1>, vector<1x1x128xf32>
    %c1_i32_27 = arith.constant 1 : i32
    %132 = vector.broadcast %c1_i32_27 : i32 to vector<1x1x128xi32>
    %133 = arith.cmpi eq, %126, %132 : vector<1x1x128xi32>
    %cst_28 = arith.constant 0.000000e+00 : f32
    %134 = vector.broadcast %59 : f32 to vector<1x1x128xf32>
    %135 = vector.broadcast %cst_28 : f32 to vector<1x1x128xf32>
    %136 = arith.select %133, %134, %135 : vector<1x1x128xi1>, vector<1x1x128xf32>
    %137 = arith.addf %131, %136 : vector<1x1x128xf32>
    %c2_i32 = arith.constant 2 : i32
    %138 = vector.broadcast %c2_i32 : i32 to vector<1x1x128xi32>
    %139 = arith.cmpi eq, %126, %138 : vector<1x1x128xi32>
    %cst_29 = arith.constant 0.000000e+00 : f32
    %140 = vector.broadcast %125 : f32 to vector<1x1x128xf32>
    %141 = vector.broadcast %cst_29 : f32 to vector<1x1x128xf32>
    %142 = arith.select %139, %140, %141 : vector<1x1x128xi1>, vector<1x1x128xf32>
    %143 = arith.addf %137, %142 : vector<1x1x128xf32>
    %c0_30 = arith.constant 0 : index
    %c0_31 = arith.constant 0 : index
    %c0_32 = arith.constant 0 : index
    %144 = vector.load %arg3[%c0_30, %c0_31, %c0_32] : memref<1x1x128xf32, #tpu.memory_space<vmem>>, vector<1x1x128xf32>
    tpu.vector_store %arg3[%c0_30, %c0_31, %c0_32], %143 {strides = array<i32>} : memref<1x1x128xf32, #tpu.memory_space<vmem>>, vector<1x1x128xf32>,
    return
  }
  func.func @transform_0(%arg0: i32) -> (i32, i32) {
    %c0_i32 = arith.constant 0 : i32
    %c0_i32_0 = arith.constant 0 : i32
    return %c0_i32, %arg0 : i32, i32
  }
  func.func @transform_1(%arg0: i32) -> (i32, i32) {
    %c0_i32 = arith.constant 0 : i32
    %c0_i32_0 = arith.constant 0 : i32
    return %c0_i32, %arg0 : i32, i32
  }
  func.func @transform_2(%arg0: i32) -> (i32, i32, i32) {
    %c0_i32 = arith.constant 0 : i32
    %c0_i32_0 = arith.constant 0 : i32
    %c0_i32_1 = arith.constant 0 : i32
    return %arg0, %c0_i32, %c0_i32_0 : i32, i32, i32
  }
}

</mosaic_0001>

<llo_original>
// kernel: tpu_custom_call.1
$region0: #{tpu_custom_call.1}
  #allocation0 [shape = 'u32[]', space=smem, size = 0x4, offset = 0x4, fixed_abs, tag = 'smem constant byte address 0x4 - core index']
  #allocation1 [shape = 'u32[144,128]{1,0:T(1,128)}', space=vmem, size = 0x12000, scoped, tag = 'internal scratch']
  %s0 = inlined_call_operand.hbm [shape: f32[8,256], index: 0, kind: input, shape index: {}]
  %s1 = inlined_call_operand.hbm [shape: f32[16,256], index: 1, kind: input, shape index: {}]
  %s2 = inlined_call_operand.hbm [shape: f32[1,1,128], index: 2, kind: output, shape index: {}]
  %s3 = sld [smem:[#allocation0]]
  $region26: #{tpu_custom_call.1} parent=0
    _
  %s5 = ssub.s32 1, %s3
  %s6 = scalar_select 0, %s5, %s3
  $region1: #{tpu_custom_call.1} parent=0
    #allocation2 [shape = 'u8[8192]{0}', space=vmem, size = 0x2000, scoped, tag = 'input window, operand 0, single buffered']
    #allocation3 [shape = 's32[1]{0}', space=sflag, size = 0x4, scoped, tag = 'scoped memory for tpu_custom_call.1']
    #allocation4 [shape = 's32[1]{0}', space=sflag, size = 0x4, scoped, tag = 'scoped memory for tpu_custom_call.1']
    #allocation5 [shape = 'u8[16384]{0}', space=vmem, size = 0x4000, scoped, tag = 'input window, operand 1, single buffered']
    #allocation6 [shape = 's32[1]{0}', space=sflag, size = 0x4, scoped, tag = 'scoped memory for tpu_custom_call.1']
    #allocation7 [shape = 'u8[512]{0}', space=vmem, size = 0x400, scoped, tag = 'output window, operand 0, single buffered']
    %7 = vsyncpa [#allocation3], 0
    %8 = vsyncpa [#allocation6], 0
    %9 = vsyncpa [#allocation4], 0
    // Predicated region
    $region2: #{tpu_custom_call.1} parent=1 // pred_check
      _
    $region3: #{tpu_custom_call.1} parent=1 // pred_check_branch
      %11 = sbr.rel (0) target = $region5
    $region4: #{tpu_custom_call.1} parent=1 // pred_region
      %s13 = ssub.s32 256, 256
      %14 = vsyncadd [#allocation3], %s13
      %s16 = sshll.u32 [#allocation2], 4
      %s17 = int_to_ptr.vmem [resolvable:$true] %s16
      %19 = dma.hbm_to_vmem [thread:$0]  %s0, 256, %s17, [#allocation3]
    $region5: #{tpu_custom_call.1} parent=1 // pred_fallthru
      _
    // Predicated region
    $region6: #{tpu_custom_call.1} parent=1 // pred_check
      _
    $region7: #{tpu_custom_call.1} parent=1 // pred_check_branch
      %21 = sbr.rel (0) target = $region9
    $region8: #{tpu_custom_call.1} parent=1 // pred_region
      %s23 = ssub.s32 512, 512
      %24 = vsyncadd [#allocation6], %s23
      %s25 = sshll.u32 [#allocation5], 4
      %s26 = int_to_ptr.vmem [resolvable:$true] %s25
      %31 = dma.hbm_to_vmem [thread:$0]  %s1, 512, %s26, [#allocation6], 256, 256, 16
    $region9: #{tpu_custom_call.1} parent=1 // pred_fallthru
      _
    // Predicated region
    $region10: #{tpu_custom_call.1} parent=1 // pred_check
      _
    $region11: #{tpu_custom_call.1} parent=1 // pred_check_branch
      %33 = sbr.rel (0) target = $region13
    $region12: #{tpu_custom_call.1} parent=1 // pred_region
      %34 = dma.done [#allocation3], 256
    $region13: #{tpu_custom_call.1} parent=1 // pred_fallthru
      _
    // Predicated region
    $region14: #{tpu_custom_call.1} parent=1 // pred_check
      _
    $region15: #{tpu_custom_call.1} parent=1 // pred_check_branch
      %36 = sbr.rel (0) target = $region17
    $region16: #{tpu_custom_call.1} parent=1 // pred_region
      %37 = dma.done [#allocation6], 512
    $region17: #{tpu_custom_call.1} parent=1 // pred_fallthru
      _
    %v38 = vld [vmem:[#allocation2] sm:$0xff]
    %v39 = vld [vmem:[#allocation2 + $0x8] sm:$0xff]
    %v40 = vld [vmem:[#allocation5] sm:$0xff]
    %v41 = vld [vmem:[#allocation5 + $0x8] sm:$0xff]
    %v42 = vld [vmem:[#allocation5 + $0x10] sm:$0xff]
    %v43 = vld [vmem:[#allocation5 + $0x18] sm:$0xff]
    %v44 = vrot.slane %v38, 4
    %v45 = vmax.f32 %v38, %v44
    %v46 = vrot.slane %v45, 2
    %v47 = vmax.f32 %v45, %v46
    %v48 = vrot.slane %v47, 1
    %v49 = vmax.f32 %v47, %v48
    %v50 = vrot.slane %v39, 4
    %v51 = vmax.f32 %v39, %v50
    %v52 = vrot.slane %v51, 2
    %v53 = vmax.f32 %v51, %v52
    %v54 = vrot.slane %v53, 1
    %v55 = vmax.f32 %v53, %v54
    %v56 = vsub.f32 %v38, %v49
    %v57 = vsub.f32 %v39, %v55
    %v58 = vmul.f32 %v56, 1.442695
    %v59 = vpow.pop %v58
    %v60 = vmul.f32 %v57, 1.442695
    %v61 = vpow.pop %v60
    %v62 = vrot.slane %v59, 4
    %v63 = vadd.f32 %v59, %v62
    %v64 = vrot.slane %v63, 2
    %v65 = vadd.f32 %v63, %v64
    %v66 = vrot.slane %v65, 1
    %v67 = vadd.f32 %v65, %v66
    %v68 = vrot.slane %v61, 4
    %v69 = vadd.f32 %v61, %v68
    %v70 = vrot.slane %v69, 2
    %v71 = vadd.f32 %v69, %v70
    %v72 = vrot.slane %v71, 1
    %v73 = vadd.f32 %v71, %v72
    %v74 = vlog2.pop %v67
    %v75 = vmul.f32 %v74, 0.6931472
    %v76 = vlog2.pop %v73
    %v77 = vmul.f32 %v76, 0.6931472
    %v78 = vadd.f32 %v49, %v75
    %v79 = vadd.f32 %v55, %v77
    %v80 = vmul.f32 %v42, %v78
    %v81 = vmul.f32 %v43, %v79
    %v84 = vrot.slane %v42, 1
    %v85 = vrot.slane %v43, 1
    %v88 = vsub.f32 %v80, %v84
    %v89 = vsub.f32 %v81, %v85
    %v92 = vrot.slane %v88, 1
    %v93 = vrot.slane %v89, 1
    %vm96 = vcmask 1040384
    %v97 = vsel %vm96, %v92, 0.0
    %v98 = vsel %vm96, %v93, 0.0
    %v99 = vadd.f32 %v97, %v98
    %100 = vadd.xlane.f32.xlu0 %v99
    %v101 = vpop.xlane.xlu0 %100
    %v102 = vrot.slane %v101, 4
    %v103 = vadd.f32 %v101, %v102
    %v104 = vrot.slane %v103, 2
    %v105 = vadd.f32 %v103, %v104
    %v106 = vrot.slane %v105, 1
    %v107 = vadd.f32 %v105, %v106
    %s108 = vtos %v107
    %s109 = sadd.f32 %s108, 0.0
    %v110 = vmax.f32 %v40, 0.0
    %v111 = vmax.f32 %v41, 0.0
    %v112 = vmin.f32 %v110, 1.0
    %v113 = vmin.f32 %v111, 1.0
    %v116 = vrot.slane %v112, 4
    %v117 = vrot.slane %v113, 4
    %v120 = vsub.f32 %v112, %v116
    %v121 = vsub.f32 %v113, %v117
    %v122 = vand.u32 2147483647, %v120
    %v123 = vand.u32 2147483647, %v121
    %v126 = vrot.slane %v122, 1
    %v127 = vrot.slane %v123, 1
    %v130 = vadd.f32 %v122, %v126
    %v131 = vadd.f32 %v123, %v127
    %v132 = vrot.slane %v122, 2
    %v133 = vrot.slane %v123, 2
    %v136 = vadd.f32 %v130, %v132
    %v137 = vadd.f32 %v131, %v133
    %v138 = vrot.slane %v122, 3
    %v139 = vrot.slane %v123, 3
    %v142 = vadd.f32 %v136, %v138
    %v143 = vadd.f32 %v137, %v139
    %v144 = vmul.f32 %v142, %v42
    %v145 = vmul.f32 %v143, %v43
    %v146 = vsel %vm96, %v144, 0.0
    %v147 = vsel %vm96, %v145, 0.0
    %v148 = vadd.f32 %v146, %v147
    %149 = vadd.xlane.f32.xlu0 %v148
    %v150 = vpop.xlane.xlu0 %149
    %v151 = vrot.slane %v150, 4
    %v152 = vadd.f32 %v150, %v151
    %v153 = vrot.slane %v152, 2
    %v154 = vadd.f32 %v152, %v153
    %v155 = vrot.slane %v154, 1
    %v156 = vadd.f32 %v154, %v155
    %s157 = vtos %v156
    %s158 = sadd.f32 %s157, 0.0
    %v159 = vmul.f32 %v112, 0.5
    %v160 = vmul.f32 %v113, 0.5
    %v163 = vrot.slane %v159, 2
    %v164 = vrot.slane %v160, 2
    %v167 = vsub.f32 %v112, %v163
    %v168 = vsub.f32 %v113, %v164
    %v169 = vadd.f32 %v112, %v163
    %v170 = vadd.f32 %v113, %v164
    %v171 = vsub.f32 %v169, %v167
    %v172 = vsub.f32 %v170, %v168
    %v175 = vrot.slane %v171, 1
    %v176 = vrot.slane %v172, 1
    %v179 = vmul.f32 %v171, %v175
    %v180 = vmul.f32 %v172, %v176
    %v183 = vrot.slane %v169, 4
    %v184 = vrot.slane %v170, 4
    %v187 = vmin.f32 %v169, %v183
    %v188 = vmin.f32 %v170, %v184
    %v191 = vrot.slane %v167, 4
    %v192 = vrot.slane %v168, 4
    %v195 = vmax.f32 %v167, %v191
    %v196 = vmax.f32 %v168, %v192
    %v197 = vsub.f32 %v187, %v195
    %v198 = vsub.f32 %v188, %v196
    %v199 = vmax.f32 %v197, 0.0
    %v200 = vmax.f32 %v198, 0.0
    %v203 = vrot.slane %v199, 1
    %v204 = vrot.slane %v200, 1
    %v207 = vmul.f32 %v199, %v203
    %v208 = vmul.f32 %v200, %v204
    %v211 = vrot.slane %v179, 4
    %v212 = vrot.slane %v180, 4
    %v215 = vadd.f32 %v179, %v211
    %v216 = vadd.f32 %v180, %v212
    %v217 = vsub.f32 %v215, %v207
    %v218 = vsub.f32 %v216, %v208
    %v219 = vmax.f32 %v169, %v183
    %v220 = vmax.f32 %v170, %v184
    %v221 = vmin.f32 %v167, %v191
    %v222 = vmin.f32 %v168, %v192
    %v223 = vsub.f32 %v219, %v221
    %v224 = vsub.f32 %v220, %v222
    %v227 = vrot.slane %v223, 1
    %v228 = vrot.slane %v224, 1
    %v231 = vmul.f32 %v223, %v227
    %v232 = vmul.f32 %v224, %v228
    %v233 = vadd.f32 %v217, 1e-08
    %v234 = vadd.f32 %v218, 1e-08
    %v235 = vrcp.pop %v233
    %v236 = vmul.f32 %v207, %v235
    %v237 = vrcp.pop %v234
    %v238 = vmul.f32 %v208, %v237
    %v239 = vsub.f32 %v231, %v217
    %v240 = vsub.f32 %v232, %v218
    %v241 = vadd.f32 %v231, 1e-08
    %v242 = vadd.f32 %v232, 1e-08
    %v243 = vrcp.pop %v241
    %v244 = vmul.f32 %v239, %v243
    %v245 = vrcp.pop %v242
    %v246 = vmul.f32 %v240, %v245
    %v247 = vsub.f32 %v236, %v244
    %v248 = vsub.f32 %v238, %v246
    %v249 = vsub.f32 1.0, %v247
    %v250 = vsub.f32 1.0, %v248
    %v251 = vmul.f32 %v42, %v249
    %v252 = vmul.f32 %v43, %v250
    %v253 = vsel %vm96, %v251, 0.0
    %v254 = vsel %vm96, %v252, 0.0
    %v255 = vadd.f32 %v253, %v254
    %256 = vadd.xlane.f32.xlu0 %v255
    %v257 = vpop.xlane.xlu0 %256
    %v258 = vrot.slane %v257, 4
    %v259 = vadd.f32 %v257, %v258
    %v260 = vrot.slane %v259, 2
    %v261 = vadd.f32 %v259, %v260
    %v262 = vrot.slane %v261, 1
    %v263 = vadd.f32 %v261, %v262
    %s264 = vtos %v263
    %s265 = sadd.f32 %s264, 0.0
    %v266 = vlaneseq
    %v267 = vand.u32 %v266, 127
    %vm268 = vcmp.eq.s32.totalorder %v267, 0
    %v269 = vstv %s109
    %v270 = vsel %vm268, %v269, 0.0
    %vm271 = vcmp.eq.s32.totalorder %v267, 1
    %v272 = vstv %s158
    %v273 = vsel %vm271, %v272, 0.0
    %v274 = vadd.f32 %v270, %v273
    %vm275 = vcmp.eq.s32.totalorder %v267, 2
    %v276 = vstv %s265
    %v277 = vsel %vm275, %v276, 0.0
    %v278 = vadd.f32 %v274, %v277
    %279 = vst [vmem:[#allocation7] sm:$0x1] %v278
    // Predicated region
    $region18: #{tpu_custom_call.1} parent=1 // pred_check
      _
    $region19: #{tpu_custom_call.1} parent=1 // pred_check_branch
      %281 = sbr.rel (0) target = $region21
    $region20: #{tpu_custom_call.1} parent=1 // pred_region
      %s283 = ssub.s32 16, 16
      %284 = vsyncadd [#allocation4], %s283
      %s286 = sshll.u32 [#allocation7], 4
      %s287 = int_to_ptr.vmem [resolvable:$true] %s286
      %289 = dma.vmem_to_hbm [thread:$0]  %s287, 16, %s2, [#allocation4]
    $region21: #{tpu_custom_call.1} parent=1 // pred_fallthru
      _
    // Predicated region
    $region22: #{tpu_custom_call.1} parent=1 // pred_check
      _
    $region23: #{tpu_custom_call.1} parent=1 // pred_check_branch
      %291 = sbr.rel (0) target = $region25
    $region24: #{tpu_custom_call.1} parent=1 // pred_region
      %292 = dma.done [#allocation4], 16
    $region25: #{tpu_custom_call.1} parent=1 // pred_fallthru
      _
    %293 = vsyncpa [#allocation3], 1
    %294 = vsyncpa [#allocation6], 1
    %295 = vsyncpa [#allocation4], 1

</llo_original>
